<compile_context>
chip_gen: v7x
topology: tpu7x:2x2x1
jax: 0.10.0
libtpu: 0.0.40
codegen_flags: <defaults>
</compile_context>

<pallas_src>
import functools

import jax
import jax.numpy as jnp
from jax.experimental import pallas as pl
from jax.experimental.pallas import tpu as pltpu


def _vmem():
    return pl.BlockSpec(memory_space=pltpu.MemorySpace.VMEM)


def _onehot_bf16(idx, iota_shape, iota_dim):
    """bf16 one-hot mask built on-chip from int32 indices (no HBM one-hot matrices)."""
    iota = jax.lax.broadcasted_iota(jnp.int32, iota_shape, iota_dim)
    return jnp.where(idx == iota, 1.0, 0.0).astype(jnp.bfloat16)


# ---------------------------------------------------------------------------
# Fused GIN layer kernel (one pallas_call per layer)
# ---------------------------------------------------------------------------

def _gin_layer_kernel(h_ref, vne_ref, batch_ref, src_ref, dst_ref, *rest,
                      num_bond, eps, relu_out):
    ea_refs = rest[:num_bond]                       # each [E, 1] int32
    tab_refs = rest[num_bond:2 * num_bond]          # each [V_i, D] bf16
    (w1_ref, b1_ref, w2_ref, b2_ref,
     h_out_ref, hin_out_ref) = rest[2 * num_bond:]

    n, d = h_ref.shape
    g = vne_ref.shape[0]
    e = src_ref.shape[0]

    # h_in = h + virtualnode_embedding[batch]  (one-hot [N,G] @ vne on the MXU)
    batch_oh = _onehot_bf16(batch_ref[...], (n, g), 1)                    # [N, G]
    h_in = h_ref[...] + jnp.dot(batch_oh, vne_ref[...].astype(jnp.bfloat16),
                                preferred_element_type=jnp.float32)
    hin_out_ref[...] = h_in                                               # reused by VN update
    h_bf = h_in.astype(jnp.bfloat16)

    # BondEncoder: sum_i onehot(edge_attr[:, i]) @ table_i, all in VMEM
    eemb = jnp.zeros((e, d), jnp.float32)
    for i in range(num_bond):
        tab = tab_refs[i][...]
        oh = _onehot_bf16(ea_refs[i][...], (e, tab.shape[0]), 1)          # [E, V_i]
        eemb = eemb + jnp.dot(oh, tab, preferred_element_type=jnp.float32)

    # message relu(x_src + edge_emb) + scatter-add to dst (gather/scatter = one-hot matmuls)
    src_oh = _onehot_bf16(src_ref[...], (e, n), 1)                        # [E, N]
    x_src = jnp.dot(src_oh, h_bf, preferred_element_type=jnp.float32)     # gather
    msg = jnp.maximum(x_src + eemb, 0.0).astype(jnp.bfloat16)
    dst_oh = _onehot_bf16(dst_ref[...], (n, e), 0)                        # [N, E]
    agg = jnp.dot(dst_oh, msg, preferred_element_type=jnp.float32)        # scatter-add

    # GIN MLP: Linear(D,2D)+BN+ReLU, Linear(2D,D) fused with the outer BatchNorm (+ReLU)
    pre = ((1.0 + eps) * h_in + agg).astype(jnp.bfloat16)
    y1 = jnp.dot(pre, w1_ref[...], preferred_element_type=jnp.float32) + b1_ref[...]
    y1 = jnp.maximum(y1, 0.0).astype(jnp.bfloat16)
    y2 = jnp.dot(y1, w2_ref[...], preferred_element_type=jnp.float32) + b2_ref[...]
    if relu_out:
        y2 = jnp.maximum(y2, 0.0)
    h_out_ref[...] = y2


def gin_layer(h, vne, batch_col, src_col, dst_row, edge_feats, bond_tabs,
              w1, b1, w2, b2, *, eps, relu_out):
    n, d = h.shape
    nb = len(bond_tabs)
    args = ([h, vne, batch_col, src_col, dst_row]
            + list(edge_feats) + list(bond_tabs) + [w1, b1, w2, b2])
    kernel = functools.partial(_gin_layer_kernel, num_bond=nb,
                               eps=float(eps), relu_out=bool(relu_out))
    return pl.pallas_call(
        kernel,
        out_shape=(jax.ShapeDtypeStruct((n, d), jnp.float32),   # new layer output h
                   jax.ShapeDtypeStruct((n, d), jnp.float32)),  # h_in (for pooling)
        in_specs=[_vmem()] * len(args),
        out_specs=(_vmem(), _vmem()),
    )(*args)


# ---------------------------------------------------------------------------
# Fused virtual-node update kernel (pool + 2x Linear+BN+ReLU)
# ---------------------------------------------------------------------------

def _vn_update_kernel(hin_ref, vne_ref, batch_row_ref,
                      w1_ref, b1_ref, w2_ref, b2_ref, vne_out_ref):
    g = vne_ref.shape[0]
    n = hin_ref.shape[0]
    pool_oh = _onehot_bf16(batch_row_ref[...], (g, n), 0)                 # [G, N]
    v_tmp = jnp.dot(pool_oh, hin_ref[...].astype(jnp.bfloat16),
                    preferred_element_type=jnp.float32) + vne_ref[...]
    v1 = jnp.dot(v_tmp.astype(jnp.bfloat16), w1_ref[...],
                 preferred_element_type=jnp.float32) + b1_ref[...]
    v1 = jnp.maximum(v1, 0.0)
    v2 = jnp.dot(v1.astype(jnp.bfloat16), w2_ref[...],
                 preferred_element_type=jnp.float32) + b2_ref[...]
    vne_out_ref[...] = jnp.maximum(v2, 0.0)


def vn_update(h_in, vne, batch_row, w1, b1, w2, b2):
    g, d = vne.shape
    return pl.pallas_call(
        _vn_update_kernel,
        out_shape=jax.ShapeDtypeStruct((g, d), jnp.float32),
        in_specs=[_vmem()] * 7,
        out_specs=_vmem(),
    )(h_in, vne, batch_row, w1, b1, w2, b2)


# ---------------------------------------------------------------------------
# Parameters (deterministic, in-script), with eval-mode BN folded into weights
# ---------------------------------------------------------------------------

def _bn_default(dim):
    # PyTorch BatchNorm1d defaults: gamma=1, beta=0, running_mean=0, running_var=1
    return dict(gamma=jnp.ones((dim,), jnp.float32), beta=jnp.zeros((dim,), jnp.float32),
                mean=jnp.zeros((dim,), jnp.float32), var=jnp.ones((dim,), jnp.float32))


def fold_linear_bn(w, b, bn, eps=1e-5):
    """Fold (x@W + b) followed by eval-mode BN into (x @ W_eff + b_eff); W_eff in bf16."""
    inv = bn["gamma"] / jnp.sqrt(bn["var"] + eps)
    w_eff = (w * inv[None, :]).astype(jnp.bfloat16)
    b_eff = ((b - bn["mean"]) * inv + bn["beta"]).reshape(1, -1).astype(jnp.float32)
    return w_eff, b_eff


def init_params(key, num_layers, emb_dim, atom_vocab, bond_vocab):
    keys = iter(jax.random.split(key, 128))

    def lin(k, fan_in, fan_out):
        w = jax.random.normal(k, (fan_in, fan_out), jnp.float32) * 0.1
        b = jnp.zeros((fan_out,), jnp.float32)
        return w, b

    params = {
        "atom_emb": [jax.random.normal(next(keys), (v, emb_dim), jnp.float32) * 0.1
                     for v in atom_vocab],
        "layers": [],
        "vn_mlps": [],
    }

    for _ in range(num_layers):
        w1, b1 = lin(next(keys), emb_dim, 2 * emb_dim)
        w2, b2 = lin(next(keys), 2 * emb_dim, emb_dim)
        w1f, b1f = fold_linear_bn(w1, b1, _bn_default(2 * emb_dim))  # GIN-MLP internal BN
        w2f, b2f = fold_linear_bn(w2, b2, _bn_default(emb_dim))      # outer batch_norms[layer]
        bond_tabs = [(jax.random.normal(next(keys), (v, emb_dim), jnp.float32) * 0.1
                      ).astype(jnp.bfloat16) for v in bond_vocab]
        params["layers"].append(dict(bond_tabs=bond_tabs, w1=w1f, b1=b1f,
                                     w2=w2f, b2=b2f, eps=0.0))

    for _ in range(num_layers - 1):
        w1, b1 = lin(next(keys), emb_dim, emb_dim)
        w2, b2 = lin(next(keys), emb_dim, emb_dim)
        w1f, b1f = fold_linear_bn(w1, b1, _bn_default(emb_dim))
        w2f, b2f = fold_linear_bn(w2, b2, _bn_default(emb_dim))
        params["vn_mlps"].append(dict(w1=w1f, b1=b1f, w2=w2f, b2=b2f))
    return params


# ---------------------------------------------------------------------------
# Forward pass (2 pallas_calls per layer; 1 for the last layer)
# ---------------------------------------------------------------------------

def gnn_node_virtualnode_forward(params, x, edge_index, edge_attr, batch,
                                 num_graphs, num_layers, emb_dim):
    n_nodes = x.shape[0]
    n_edges = edge_index.shape[1]

    # AtomEncoder: sum of per-feature embedding lookups (tiny, done once; JAX glue)
    h = jnp.zeros((n_nodes, emb_dim), jnp.float32)
    for i, table in enumerate(params["atom_emb"]):
        h = h + table[x[:, i]]

    # int32 index operands; the kernels build one-hot masks from them on-chip
    batch_col = batch.reshape(n_nodes, 1).astype(jnp.int32)
    batch_row = batch.reshape(1, n_nodes).astype(jnp.int32)
    src_col = edge_index[0].reshape(n_edges, 1).astype(jnp.int32)
    dst_row = edge_index[1].reshape(1, n_edges).astype(jnp.int32)
    edge_feats = [edge_attr[:, i].reshape(n_edges, 1).astype(jnp.int32)
                  for i in range(edge_attr.shape[1])]

    # virtualnode_embedding = Embedding(1, D) initialized to 0, broadcast per graph
    vne = jnp.zeros((num_graphs, emb_dim), jnp.float32)

    for layer in range(num_layers):
        lp = params["layers"][layer]
        h_new, h_in = gin_layer(h, vne, batch_col, src_col, dst_row, edge_feats,
                                lp["bond_tabs"], lp["w1"], lp["b1"], lp["w2"], lp["b2"],
                                eps=lp["eps"], relu_out=(layer != num_layers - 1))
        if layer < num_layers - 1:
            vp = params["vn_mlps"][layer]
            vne = vn_update(h_in, vne, batch_row, vp["w1"], vp["b1"], vp["w2"], vp["b2"])
        h = h_new

    return h  # JK == 'last'


# ---------------------------------------------------------------------------
# Main
# ---------------------------------------------------------------------------

if __name__ == "__main__":
    NUM_LAYERS = 2
    EMB_DIM = 128
    N_NODES = 24
    N_EDGES = 40
    N_GRAPHS = 4
    ATOM_VOCAB = [16, 8, 8]
    BOND_VOCAB = [8, 4]

    key = jax.random.PRNGKey(0)
    k_param, k_x, k_e, k_attr = jax.random.split(key, 4)

    params = init_params(k_param, NUM_LAYERS, EMB_DIM, ATOM_VOCAB, BOND_VOCAB)

    x = jnp.stack(
        [jax.random.randint(jax.random.fold_in(k_x, i), (N_NODES,), 0, v)
         for i, v in enumerate(ATOM_VOCAB)], axis=1).astype(jnp.int32)
    edge_index = jax.random.randint(k_e, (2, N_EDGES), 0, N_NODES).astype(jnp.int32)
    edge_attr = jnp.stack(
        [jax.random.randint(jax.random.fold_in(k_attr, i), (N_EDGES,), 0, v)
         for i, v in enumerate(BOND_VOCAB)], axis=1).astype(jnp.int32)
    batch = jnp.repeat(jnp.arange(N_GRAPHS, dtype=jnp.int32), N_NODES // N_GRAPHS)

    out = gnn_node_virtualnode_forward(
        params, x, edge_index, edge_attr, batch,
        num_graphs=N_GRAPHS, num_layers=NUM_LAYERS, emb_dim=EMB_DIM,
    )
    out = jax.block_until_ready(out)
    assert out.shape == (N_NODES, EMB_DIM) and out.dtype == jnp.float32
    print("KERNEL_OK")
</pallas_src>

<mosaic_0001>
module attributes {stable_mosaic.version = 11 : i64} {
  func.func @_gin_layer_kernel(%arg0: memref<24x128xf32, #tpu.memory_space<vmem>>, %arg1: memref<4x128xf32, #tpu.memory_space<vmem>>, %arg2: memref<24x1xi32, #tpu.memory_space<vmem>>, %arg3: memref<40x1xi32, #tpu.memory_space<vmem>>, %arg4: memref<1x40xi32, #tpu.memory_space<vmem>>, %arg5: memref<40x1xi32, #tpu.memory_space<vmem>>, %arg6: memref<40x1xi32, #tpu.memory_space<vmem>>, %arg7: memref<8x128xbf16, #tpu.memory_space<vmem>>, %arg8: memref<4x128xbf16, #tpu.memory_space<vmem>>, %arg9: memref<128x256xbf16, #tpu.memory_space<vmem>>, %arg10: memref<1x256xf32, #tpu.memory_space<vmem>>, %arg11: memref<256x128xbf16, #tpu.memory_space<vmem>>, %arg12: memref<1x128xf32, #tpu.memory_space<vmem>>, %arg13: memref<24x128xf32, #tpu.memory_space<vmem>>, %arg14: memref<24x128xf32, #tpu.memory_space<vmem>>) attributes {dimension_semantics = [], scalar_prefetch = 0 : i64, scratch_operands = 0 : i64, tpu.core_type = #tpu.core_type<tc>} {
    %c0 = arith.constant 0 : index
    %c0_0 = arith.constant 0 : index
    %0 = vector.load %arg2[%c0, %c0_0] : memref<24x1xi32, #tpu.memory_space<vmem>>, vector<24x1xi32>
    %1 = tpu.iota {dimensions = array<i32: 1>} : vector<24x4xi32>
    %2 = vector.broadcast %0 : vector<24x1xi32> to vector<24x4xi32>
    %3 = arith.cmpi eq, %2, %1 : vector<24x4xi32>
    %cst = arith.constant 1.000000e+00 : f32
    %cst_1 = arith.constant 0.000000e+00 : f32
    %4 = vector.broadcast %cst : f32 to vector<24x4xf32>
    %5 = vector.broadcast %cst_1 : f32 to vector<24x4xf32>
    %6 = arith.select %3, %4, %5 : vector<24x4xi1>, vector<24x4xf32>
    %7 = arith.truncf %6 : vector<24x4xf32> to vector<24x4xbf16>
    %c0_2 = arith.constant 0 : index
    %c0_3 = arith.constant 0 : index
    %8 = vector.load %arg0[%c0_2, %c0_3] : memref<24x128xf32, #tpu.memory_space<vmem>>, vector<24x128xf32>
    %c0_4 = arith.constant 0 : index
    %c0_5 = arith.constant 0 : index
    %9 = vector.load %arg1[%c0_4, %c0_5] : memref<4x128xf32, #tpu.memory_space<vmem>>, vector<4x128xf32>
    %10 = arith.truncf %9 : vector<4x128xf32> to vector<4x128xbf16>
    %cst_6 = arith.constant dense<0.000000e+00> : vector<24x128xf32>
    %11 = tpu.matmul %7, %10, %cst_6 {dimension_numbers = #tpu.dot_dimension_numbers<[1], [0], [0], [1], [0, 0, 1, 1], [], []>} : vector<24x4xbf16>, vector<4x128xbf16>, vector<24x128xf32> -> vector<24x128xf32>
    %12 = arith.addf %8, %11 : vector<24x128xf32>
    %c0_7 = arith.constant 0 : index
    %c0_8 = arith.constant 0 : index
    %13 = vector.load %arg14[%c0_7, %c0_8] : memref<24x128xf32, #tpu.memory_space<vmem>>, vector<24x128xf32>
    tpu.vector_store %arg14[%c0_7, %c0_8], %12 {strides = array<i32>} : memref<24x128xf32, #tpu.memory_space<vmem>>, vector<24x128xf32>,
    %14 = arith.truncf %12 : vector<24x128xf32> to vector<24x128xbf16>
    %cst_9 = arith.constant 0.000000e+00 : f32
    %15 = vector.broadcast %cst_9 : f32 to vector<40x128xf32>
    %c0_10 = arith.constant 0 : index
    %c0_11 = arith.constant 0 : index
    %16 = vector.load %arg7[%c0_10, %c0_11] : memref<8x128xbf16, #tpu.memory_space<vmem>>, vector<8x128xbf16>
    %c0_12 = arith.constant 0 : index
    %c0_13 = arith.constant 0 : index
    %17 = vector.load %arg5[%c0_12, %c0_13] : memref<40x1xi32, #tpu.memory_space<vmem>>, vector<40x1xi32>
    %18 = tpu.iota {dimensions = array<i32: 1>} : vector<40x8xi32>
    %19 = vector.broadcast %17 : vector<40x1xi32> to vector<40x8xi32>
    %20 = arith.cmpi eq, %19, %18 : vector<40x8xi32>
    %cst_14 = arith.constant 1.000000e+00 : f32
    %cst_15 = arith.constant 0.000000e+00 : f32
    %21 = vector.broadcast %cst_14 : f32 to vector<40x8xf32>
    %22 = vector.broadcast %cst_15 : f32 to vector<40x8xf32>
    %23 = arith.select %20, %21, %22 : vector<40x8xi1>, vector<40x8xf32>
    %24 = arith.truncf %23 : vector<40x8xf32> to vector<40x8xbf16>
    %cst_16 = arith.constant dense<0.000000e+00> : vector<40x128xf32>
    %25 = tpu.matmul %24, %16, %cst_16 {dimension_numbers = #tpu.dot_dimension_numbers<[1], [0], [0], [1], [0, 0, 1, 1], [], []>} : vector<40x8xbf16>, vector<8x128xbf16>, vector<40x128xf32> -> vector<40x128xf32>
    %26 = arith.addf %15, %25 : vector<40x128xf32>
    %c0_17 = arith.constant 0 : index
    %c0_18 = arith.constant 0 : index
    %27 = vector.load %arg8[%c0_17, %c0_18] : memref<4x128xbf16, #tpu.memory_space<vmem>>, vector<4x128xbf16>
    %c0_19 = arith.constant 0 : index
    %c0_20 = arith.constant 0 : index
    %28 = vector.load %arg6[%c0_19, %c0_20] : memref<40x1xi32, #tpu.memory_space<vmem>>, vector<40x1xi32>
    %29 = tpu.iota {dimensions = array<i32: 1>} : vector<40x4xi32>
    %30 = vector.broadcast %28 : vector<40x1xi32> to vector<40x4xi32>
    %31 = arith.cmpi eq, %30, %29 : vector<40x4xi32>
    %cst_21 = arith.constant 1.000000e+00 : f32
    %cst_22 = arith.constant 0.000000e+00 : f32
    %32 = vector.broadcast %cst_21 : f32 to vector<40x4xf32>
    %33 = vector.broadcast %cst_22 : f32 to vector<40x4xf32>
    %34 = arith.select %31, %32, %33 : vector<40x4xi1>, vector<40x4xf32>
    %35 = arith.truncf %34 : vector<40x4xf32> to vector<40x4xbf16>
    %cst_23 = arith.constant dense<0.000000e+00> : vector<40x128xf32>
    %36 = tpu.matmul %35, %27, %cst_23 {dimension_numbers = #tpu.dot_dimension_numbers<[1], [0], [0], [1], [0, 0, 1, 1], [], []>} : vector<40x4xbf16>, vector<4x128xbf16>, vector<40x128xf32> -> vector<40x128xf32>
    %37 = arith.addf %26, %36 : vector<40x128xf32>
    %c0_24 = arith.constant 0 : index
    %c0_25 = arith.constant 0 : index
    %38 = vector.load %arg3[%c0_24, %c0_25] : memref<40x1xi32, #tpu.memory_space<vmem>>, vector<40x1xi32>
    %39 = tpu.iota {dimensions = array<i32: 1>} : vector<40x24xi32>
    %40 = vector.broadcast %38 : vector<40x1xi32> to vector<40x24xi32>
    %41 = arith.cmpi eq, %40, %39 : vector<40x24xi32>
    %cst_26 = arith.constant 1.000000e+00 : f32
    %cst_27 = arith.constant 0.000000e+00 : f32
    %42 = vector.broadcast %cst_26 : f32 to vector<40x24xf32>
    %43 = vector.broadcast %cst_27 : f32 to vector<40x24xf32>
    %44 = arith.select %41, %42, %43 : vector<40x24xi1>, vector<40x24xf32>
    %45 = arith.truncf %44 : vector<40x24xf32> to vector<40x24xbf16>
    %cst_28 = arith.constant dense<0.000000e+00> : vector<40x128xf32>
    %46 = tpu.matmul %45, %14, %cst_28 {dimension_numbers = #tpu.dot_dimension_numbers<[1], [0], [0], [1], [0, 0, 1, 1], [], []>} : vector<40x24xbf16>, vector<24x128xbf16>, vector<40x128xf32> -> vector<40x128xf32>
    %47 = arith.addf %46, %37 : vector<40x128xf32>
    %cst_29 = arith.constant 0.000000e+00 : f32
    %48 = vector.broadcast %cst_29 : f32 to vector<40x128xf32>
    %49 = arith.maximumf %47, %48 : vector<40x128xf32>
    %50 = arith.truncf %49 : vector<40x128xf32> to vector<40x128xbf16>
    %c0_30 = arith.constant 0 : index
    %c0_31 = arith.constant 0 : index
    %51 = vector.load %arg4[%c0_30, %c0_31] : memref<1x40xi32, #tpu.memory_space<vmem>>, vector<1x40xi32>
    %52 = tpu.iota {dimensions = array<i32: 0>} : vector<24x40xi32>
    %53 = vector.broadcast %51 : vector<1x40xi32> to vector<24x40xi32>
    %54 = arith.cmpi eq, %53, %52 : vector<24x40xi32>
    %cst_32 = arith.constant 1.000000e+00 : f32
    %cst_33 = arith.constant 0.000000e+00 : f32
    %55 = vector.broadcast %cst_32 : f32 to vector<24x40xf32>
    %56 = vector.broadcast %cst_33 : f32 to vector<24x40xf32>
    %57 = arith.select %54, %55, %56 : vector<24x40xi1>, vector<24x40xf32>
    %58 = arith.truncf %57 : vector<24x40xf32> to vector<24x40xbf16>
    %cst_34 = arith.constant dense<0.000000e+00> : vector<24x128xf32>
    %59 = tpu.matmul %58, %50, %cst_34 {dimension_numbers = #tpu.dot_dimension_numbers<[1], [0], [0], [1], [0, 0, 1, 1], [], []>} : vector<24x40xbf16>, vector<40x128xbf16>, vector<24x128xf32> -> vector<24x128xf32>
    %cst_35 = arith.constant 1.000000e+00 : f32
    %60 = vector.broadcast %cst_35 : f32 to vector<24x128xf32>
    %61 = arith.mulf %60, %12 : vector<24x128xf32>
    %62 = arith.addf %61, %59 : vector<24x128xf32>
    %63 = arith.truncf %62 : vector<24x128xf32> to vector<24x128xbf16>
    %c0_36 = arith.constant 0 : index
    %c0_37 = arith.constant 0 : index
    %64 = vector.load %arg9[%c0_36, %c0_37] : memref<128x256xbf16, #tpu.memory_space<vmem>>, vector<128x256xbf16>
    %cst_38 = arith.constant dense<0.000000e+00> : vector<24x256xf32>
    %65 = tpu.matmul %63, %64, %cst_38 {dimension_numbers = #tpu.dot_dimension_numbers<[1], [0], [0], [1], [0, 0, 1, 1], [], []>} : vector<24x128xbf16>, vector<128x256xbf16>, vector<24x256xf32> -> vector<24x256xf32>
    %c0_39 = arith.constant 0 : index
    %c0_40 = arith.constant 0 : index
    %66 = vector.load %arg10[%c0_39, %c0_40] : memref<1x256xf32, #tpu.memory_space<vmem>>, vector<1x256xf32>
    %67 = vector.broadcast %66 : vector<1x256xf32> to vector<24x256xf32>
    %68 = arith.addf %65, %67 : vector<24x256xf32>
    %cst_41 = arith.constant 0.000000e+00 : f32
    %69 = vector.broadcast %cst_41 : f32 to vector<24x256xf32>
    %70 = arith.maximumf %68, %69 : vector<24x256xf32>
    %71 = arith.truncf %70 : vector<24x256xf32> to vector<24x256xbf16>
    %c0_42 = arith.constant 0 : index
    %c0_43 = arith.constant 0 : index
    %72 = vector.load %arg11[%c0_42, %c0_43] : memref<256x128xbf16, #tpu.memory_space<vmem>>, vector<256x128xbf16>
    %cst_44 = arith.constant dense<0.000000e+00> : vector<24x128xf32>
    %73 = tpu.matmul %71, %72, %cst_44 {dimension_numbers = #tpu.dot_dimension_numbers<[1], [0], [0], [1], [0, 0, 1, 1], [], []>} : vector<24x256xbf16>, vector<256x128xbf16>, vector<24x128xf32> -> vector<24x128xf32>
    %c0_45 = arith.constant 0 : index
    %c0_46 = arith.constant 0 : index
    %74 = vector.load %arg12[%c0_45, %c0_46] : memref<1x128xf32, #tpu.memory_space<vmem>>, vector<1x128xf32>
    %75 = vector.broadcast %74 : vector<1x128xf32> to vector<24x128xf32>
    %76 = arith.addf %73, %75 : vector<24x128xf32>
    %cst_47 = arith.constant 0.000000e+00 : f32
    %77 = vector.broadcast %cst_47 : f32 to vector<24x128xf32>
    %78 = arith.maximumf %76, %77 : vector<24x128xf32>
    %c0_48 = arith.constant 0 : index
    %c0_49 = arith.constant 0 : index
    %79 = vector.load %arg13[%c0_48, %c0_49] : memref<24x128xf32, #tpu.memory_space<vmem>>, vector<24x128xf32>
    tpu.vector_store %arg13[%c0_48, %c0_49], %78 {strides = array<i32>} : memref<24x128xf32, #tpu.memory_space<vmem>>, vector<24x128xf32>,
    return
  }
}

</mosaic_0001>

<llo_original>
// kernel: tpu_custom_call.1
$region0: #{tpu_custom_call.1}
  #allocation0 [shape = 'u32[]', space=smem, size = 0x4, offset = 0x4, fixed_abs, tag = 'smem constant byte address 0x4 - core index']
  #allocation1 [shape = 'u32[144,128]{1,0:T(1,128)}', space=vmem, size = 0x12000, scoped, tag = 'internal scratch']
  %s0 = inlined_call_operand.vmem [shape: f32[24,128], index: 0, kind: input, shape index: {}]
  %s1 = inlined_call_operand.vmem [shape: f32[4,128], index: 1, kind: input, shape index: {}]
  %s2 = inlined_call_operand.vmem [shape: s32[24,1], index: 2, kind: input, shape index: {}]
  %s3 = inlined_call_operand.vmem [shape: s32[40,1], index: 3, kind: input, shape index: {}]
  %s4 = inlined_call_operand.vmem [shape: s32[1,40], index: 4, kind: input, shape index: {}]
  %s5 = inlined_call_operand.vmem [shape: s32[40,1], index: 5, kind: input, shape index: {}]
  %s6 = inlined_call_operand.vmem [shape: s32[40,1], index: 6, kind: input, shape index: {}]
  %s7 = inlined_call_operand.vmem [shape: bf16[8,128], index: 7, kind: input, shape index: {}]
  %s8 = inlined_call_operand.vmem [shape: bf16[4,128], index: 8, kind: input, shape index: {}]
  %s9 = inlined_call_operand.vmem [shape: bf16[128,256], index: 9, kind: input, shape index: {}]
  %s10 = inlined_call_operand.vmem [shape: f32[1,256], index: 10, kind: input, shape index: {}]
  %s11 = inlined_call_operand.hbm [shape: bf16[256,128], index: 11, kind: input, shape index: {}]
  %s12 = inlined_call_operand.vmem [shape: f32[1,128], index: 12, kind: input, shape index: {}]
  %s13 = inlined_call_operand.hbm [shape: f32[24,128], index: 13, kind: output, shape index: {0}]
  %s14 = inlined_call_operand.hbm [shape: f32[24,128], index: 14, kind: output, shape index: {1}]
  %15 = xla_tuple %s13, %s14
  %s16 = sld [smem:[#allocation0]]
  $region74: #{tpu_custom_call.1} parent=0
    _
  %s18 = ssub.s32 1, %s16
  %s19 = scalar_select 0, %s18, %s16
  $region1: #{tpu_custom_call.1} parent=0
    #allocation2 [shape = 'u8[65536]{0}', space=vmem, size = 0x10000, scoped, tag = 'input window, operand 11, single buffered']
    #allocation3 [shape = 's32[1]{0}', space=sflag, size = 0x4, scoped, tag = 'scoped memory for tpu_custom_call.1']
    #allocation4 [shape = 's32[1]{0}', space=sflag, size = 0x4, scoped, tag = 'scoped memory for tpu_custom_call.1']
    #allocation5 [shape = 'u8[12288]{0}', space=vmem, size = 0x3000, scoped, tag = 'output window, operand 0, single buffered']
    #allocation6 [shape = 'u8[12288]{0}', space=vmem, size = 0x3000, scoped, tag = 'output window, operand 1, single buffered']
    #allocation7 [shape = 's32[1]{0}', space=sflag, size = 0x4, scoped, tag = 'scoped memory for tpu_custom_call.1']
    %20 = vsyncpa [#allocation3], 0
    %21 = vsyncpa [#allocation4], 0
    %22 = vsyncpa [#allocation7], 0
    // Predicated region
    $region2: #{tpu_custom_call.1} parent=1 // pred_check
      _
    $region3: #{tpu_custom_call.1} parent=1 // pred_check_branch
      %24 = sbr.rel (0) target = $region5
    $region4: #{tpu_custom_call.1} parent=1 // pred_region
      _
    $region5: #{tpu_custom_call.1} parent=1 // pred_fallthru
      _
    // Predicated region
    $region6: #{tpu_custom_call.1} parent=1 // pred_check
      _
    $region7: #{tpu_custom_call.1} parent=1 // pred_check_branch
      %26 = sbr.rel (0) target = $region9
    $region8: #{tpu_custom_call.1} parent=1 // pred_region
      _
    $region9: #{tpu_custom_call.1} parent=1 // pred_fallthru
      _
    // Predicated region
    $region10: #{tpu_custom_call.1} parent=1 // pred_check
      _
    $region11: #{tpu_custom_call.1} parent=1 // pred_check_branch
      %28 = sbr.rel (0) target = $region13
    $region12: #{tpu_custom_call.1} parent=1 // pred_region
      _
    $region13: #{tpu_custom_call.1} parent=1 // pred_fallthru
      _
    // Predicated region
    $region14: #{tpu_custom_call.1} parent=1 // pred_check
      _
    $region15: #{tpu_custom_call.1} parent=1 // pred_check_branch
      %30 = sbr.rel (0) target = $region17
    $region16: #{tpu_custom_call.1} parent=1 // pred_region
      _
    $region17: #{tpu_custom_call.1} parent=1 // pred_fallthru
      _
    // Predicated region
    $region18: #{tpu_custom_call.1} parent=1 // pred_check
      _
    $region19: #{tpu_custom_call.1} parent=1 // pred_check_branch
      %32 = sbr.rel (0) target = $region21
    $region20: #{tpu_custom_call.1} parent=1 // pred_region
      _
    $region21: #{tpu_custom_call.1} parent=1 // pred_fallthru
      _
    // Predicated region
    $region22: #{tpu_custom_call.1} parent=1 // pred_check
      _
    $region23: #{tpu_custom_call.1} parent=1 // pred_check_branch
      %34 = sbr.rel (0) target = $region25
    $region24: #{tpu_custom_call.1} parent=1 // pred_region
      _
    $region25: #{tpu_custom_call.1} parent=1 // pred_fallthru
      _
    // Predicated region
    $region26: #{tpu_custom_call.1} parent=1 // pred_check
      _
    $region27: #{tpu_custom_call.1} parent=1 // pred_check_branch
      %36 = sbr.rel (0) target = $region29
    $region28: #{tpu_custom_call.1} parent=1 // pred_region
      _
    $region29: #{tpu_custom_call.1} parent=1 // pred_fallthru
      _
    // Predicated region
    $region30: #{tpu_custom_call.1} parent=1 // pred_check
      _
    $region31: #{tpu_custom_call.1} parent=1 // pred_check_branch
      %38 = sbr.rel (0) target = $region33
    $region32: #{tpu_custom_call.1} parent=1 // pred_region
      _
    $region33: #{tpu_custom_call.1} parent=1 // pred_fallthru
      _
    // Predicated region
    $region34: #{tpu_custom_call.1} parent=1 // pred_check
      _
    $region35: #{tpu_custom_call.1} parent=1 // pred_check_branch
      %40 = sbr.rel (0) target = $region37
    $region36: #{tpu_custom_call.1} parent=1 // pred_region
      _
    $region37: #{tpu_custom_call.1} parent=1 // pred_fallthru
      _
    // Predicated region
    $region38: #{tpu_custom_call.1} parent=1 // pred_check
      _
    $region39: #{tpu_custom_call.1} parent=1 // pred_check_branch
      %42 = sbr.rel (0) target = $region41
    $region40: #{tpu_custom_call.1} parent=1 // pred_region
      _
    $region41: #{tpu_custom_call.1} parent=1 // pred_fallthru
      _
    // Predicated region
    $region42: #{tpu_custom_call.1} parent=1 // pred_check
      _
    $region43: #{tpu_custom_call.1} parent=1 // pred_check_branch
      %44 = sbr.rel (0) target = $region45
    $region44: #{tpu_custom_call.1} parent=1 // pred_region
      _
    $region45: #{tpu_custom_call.1} parent=1 // pred_fallthru
      _
    // Predicated region
    $region46: #{tpu_custom_call.1} parent=1 // pred_check
      _
    $region47: #{tpu_custom_call.1} parent=1 // pred_check_branch
      %46 = sbr.rel (0) target = $region49
    $region48: #{tpu_custom_call.1} parent=1 // pred_region
      %s48 = ssub.s32 2048, 2048
      %49 = vsyncadd [#allocation3], %s48
      %s50 = sshll.u32 [#allocation2], 4
      %s51 = int_to_ptr.vmem [resolvable:$true] %s50
      %56 = dma.hbm_to_vmem [thread:$0]  %s11, 2048, %s51, [#allocation3], 64, 64, 4
    $region49: #{tpu_custom_call.1} parent=1 // pred_fallthru
      _
    // Predicated region
    $region50: #{tpu_custom_call.1} parent=1 // pred_check
      _
    $region51: #{tpu_custom_call.1} parent=1 // pred_check_branch
      %58 = sbr.rel (0) target = $region53
    $region52: #{tpu_custom_call.1} parent=1 // pred_region
      _
    $region53: #{tpu_custom_call.1} parent=1 // pred_fallthru
      _
    // Predicated region
    $region54: #{tpu_custom_call.1} parent=1 // pred_check
      _
    $region55: #{tpu_custom_call.1} parent=1 // pred_check_branch
      %60 = sbr.rel (0) target = $region57
    $region56: #{tpu_custom_call.1} parent=1 // pred_region
      %61 = dma.done [#allocation3], 2048
    $region57: #{tpu_custom_call.1} parent=1 // pred_fallthru
      _
    %v63 = vld [vmem:[%s2] sm:$0xff]
    %v64 = vld [vmem:[%s2 + $0x8] sm:$0xff]
    %v65 = vld [vmem:[%s2 + $0x10] sm:$0xff]
    %v66 = vlaneseq
    %v67 = vand.u32 %v66, 127
    %68 = vset.pattern.permute.xlu0 0
    %69 = vperm.xlu0 %68, %v63
    %v70 = vpop.permute.xlu0 %69
    %71 = vset.pattern.permute.xlu0 0
    %72 = vperm.xlu0 %71, %v64
    %v73 = vpop.permute.xlu0 %72
    %74 = vset.pattern.permute.xlu0 0
    %75 = vperm.xlu0 %74, %v65
    %v76 = vpop.permute.xlu0 %75
    %vm77 = vcmp.eq.s32.totalorder %v70, %v67
    %vm78 = vcmp.eq.s32.totalorder %v73, %v67
    %vm79 = vcmp.eq.s32.totalorder %v76, %v67
    %v80 = vsel %vm77, 1.0, 0.0
    %v81 = vsel %vm78, 1.0, 0.0
    %v82 = vsel %vm79, 1.0, 0.0
    %v83 = vpack.c.bf16 %v81, %v80
    %v84 = vpack.c.bf16 %v82, %v82
    %v85 = vld [vmem:[%s0] sm:$0xff]
    %v86 = vld [vmem:[%s0 + $0x8] sm:$0xff]
    %v87 = vld [vmem:[%s0 + $0x10] sm:$0xff]
    %v88 = vld [vmem:[%s1] sm:$0xf]
    %v89 = vpack.c.bf16 %v88, %v88
    %vm90 = vcmask 31744
    %v92 = vsel %vm90, %v83, 0
    %v95 = vsel %vm90, %v84, 0
    %vm97 = vcmask 1041408
    %v99 = vsel %vm97, %v89, 0
    %101 = vmatprep.subr.bf16.mxu0 0
    %102 = vmatpush1.bf16.msra.mxu0 %v99
    %103 = vmatprep.subr.bf16.mxu0 0
    %104 = vmatpush1.bf16.msra.mxu0 0
    %105 = vmatprep.subr.bf16.mxu0 0
    %106 = vmatpush1.bf16.msra.mxu0 0
    %107 = vmatprep.subr.bf16.mxu0 0
    %108 = vmatpush1.bf16.msra.mxu0 0
    %109 = vmatprep.subr.bf16.mxu0 0
    %110 = vmatpush1.bf16.msra.mxu0 0
    %111 = vmatprep.subr.bf16.mxu0 0
    %112 = vmatpush1.bf16.msra.mxu0 0
    %113 = vmatprep.subr.bf16.mxu0 0
    %114 = vmatpush1.bf16.msra.mxu0 0
    %115 = vmatprep.subr.bf16.mxu0 0
    %116 = vmatpush1.bf16.msra.mxu0 0
    %117 = vmatprep.subr.bf16.mxu0 0
    %118 = vmatpush1.bf16.msra.mxu0 0
    %119 = vmatprep.subr.bf16.mxu0 0
    %120 = vmatpush1.bf16.msra.mxu0 0
    %121 = vmatprep.subr.bf16.mxu0 0
    %122 = vmatpush1.bf16.msra.mxu0 0
    %123 = vmatprep.subr.bf16.mxu0 0
    %124 = vmatpush1.bf16.msra.mxu0 0
    %125 = vmatprep.subr.bf16.mxu0 0
    %126 = vmatpush1.bf16.msra.mxu0 0
    %127 = vmatprep.subr.bf16.mxu0 0
    %128 = vmatpush1.bf16.msra.mxu0 0
    %129 = vmatprep.subr.bf16.mxu0 0
    %130 = vmatpush1.bf16.msra.mxu0 0
    %131 = vmatprep.subr.bf16.mxu0 0
    %132 = vmatpush1.bf16.msra.mxu0 0
    %133 = vmatprep.mubr.bf16.mxu0 0
    %134 = vmatmul.mubr.bf16.gmra.mrb[0].mxu0 %v92
    %v135 = vpop.f32.mrb[0].mxu0
    %v136 = vadd.f32 0.0, %v135
    %v137 = vpop.f32.mrb[0].mxu0
    %v138 = vpop.f32.mrb[0].mxu0
    %v139 = vadd.f32 0.0, %v138
    %v140 = vpop.f32.mrb[0].mxu0
    %141 = vmatprep.mubr.bf16.mxu0 0
    %142 = vmatmul.mubr.bf16.gmra.mrb[0].mxu0 %v95
    %v143 = vpop.f32.mrb[0].mxu0
    %v144 = vadd.f32 0.0, %v143
    %v145 = vpop.f32.mrb[0].mxu0
    %v146 = vpop.f32.mrb[0].mxu0
    %v147 = vpop.f32.mrb[0].mxu0
    %148 = vdwg.mxu0
    %v149 = vadd.f32 %v85, %v136
    %v150 = vadd.f32 %v86, %v139
    %v151 = vadd.f32 %v87, %v144
    %152 = vst [vmem:[#allocation6] sm:$0xff] %v149
    %153 = vst [vmem:[#allocation6 + $0x8] sm:$0xff] %v150
    %154 = vst [vmem:[#allocation6 + $0x10] sm:$0xff] %v151
    %v155 = vpack.c.bf16 %v150, %v149
    %v156 = vpack.c.bf16 %v151, %v151
    %v157 = vld [vmem:[%s7] sm:$0xf]
    %v158 = vld [vmem:[%s5] sm:$0xff]
    %v159 = vld [vmem:[%s5 + $0x8] sm:$0xff]
    %v160 = vld [vmem:[%s5 + $0x10] sm:$0xff]
    %v161 = vld [vmem:[%s5 + $0x18] sm:$0xff]
    %v162 = vld [vmem:[%s5 + $0x20] sm:$0xff]
    %163 = vset.pattern.permute.xlu0 0
    %164 = vperm.xlu0 %163, %v158
    %v165 = vpop.permute.xlu0 %164
    %166 = vset.pattern.permute.xlu0 0
    %167 = vperm.xlu0 %166, %v159
    %v168 = vpop.permute.xlu0 %167
    %169 = vset.pattern.permute.xlu0 0
    %170 = vperm.xlu0 %169, %v160
    %v171 = vpop.permute.xlu0 %170
    %172 = vset.pattern.permute.xlu0 0
    %173 = vperm.xlu0 %172, %v161
    %v174 = vpop.permute.xlu0 %173
    %175 = vset.pattern.permute.xlu0 0
    %176 = vperm.xlu0 %175, %v162
    %v177 = vpop.permute.xlu0 %176
    %vm178 = vcmp.eq.s32.totalorder %v165, %v67
    %vm179 = vcmp.eq.s32.totalorder %v168, %v67
    %vm180 = vcmp.eq.s32.totalorder %v171, %v67
    %vm181 = vcmp.eq.s32.totalorder %v174, %v67
    %vm182 = vcmp.eq.s32.totalorder %v177, %v67
    %v183 = vsel %vm178, 1.0, 0.0
    %v184 = vsel %vm179, 1.0, 0.0
    %v185 = vsel %vm180, 1.0, 0.0
    %v186 = vsel %vm181, 1.0, 0.0
    %v187 = vsel %vm182, 1.0, 0.0
    %v188 = vpack.c.bf16 %v184, %v183
    %v189 = vpack.c.bf16 %v186, %v185
    %v190 = vpack.c.bf16 %v187, %v187
    %v191 = vld [vmem:[%s8] sm:$0x3]
    %v192 = vld [vmem:[%s6] sm:$0xff]
    %v193 = vld [vmem:[%s6 + $0x8] sm:$0xff]
    %v194 = vld [vmem:[%s6 + $0x10] sm:$0xff]
    %v195 = vld [vmem:[%s6 + $0x18] sm:$0xff]
    %v196 = vld [vmem:[%s6 + $0x20] sm:$0xff]
    %197 = vset.pattern.permute.xlu0 0
    %198 = vperm.xlu0 %197, %v192
    %v199 = vpop.permute.xlu0 %198
    %200 = vset.pattern.permute.xlu0 0
    %201 = vperm.xlu0 %200, %v193
    %v202 = vpop.permute.xlu0 %201
    %203 = vset.pattern.permute.xlu0 0
    %204 = vperm.xlu0 %203, %v194
    %v205 = vpop.permute.xlu0 %204
    %206 = vset.pattern.permute.xlu0 0
    %207 = vperm.xlu0 %206, %v195
    %v208 = vpop.permute.xlu0 %207
    %209 = vset.pattern.permute.xlu0 0
    %210 = vperm.xlu0 %209, %v196
    %v211 = vpop.permute.xlu0 %210
    %vm212 = vcmp.eq.s32.totalorder %v199, %v67
    %vm213 = vcmp.eq.s32.totalorder %v202, %v67
    %vm214 = vcmp.eq.s32.totalorder %v205, %v67
    %vm215 = vcmp.eq.s32.totalorder %v208, %v67
    %vm216 = vcmp.eq.s32.totalorder %v211, %v67
    %v217 = vsel %vm212, 1.0, 0.0
    %v218 = vsel %vm213, 1.0, 0.0
    %v219 = vsel %vm214, 1.0, 0.0
    %v220 = vsel %vm215, 1.0, 0.0
    %v221 = vsel %vm216, 1.0, 0.0
    %v222 = vpack.c.bf16 %v218, %v217
    %v223 = vpack.c.bf16 %v220, %v219
    %v224 = vpack.c.bf16 %v221, %v221
    %v226 = vsel %vm90, %v222, 0
    %v229 = vsel %vm90, %v223, 0
    %v232 = vsel %vm90, %v224, 0
    %v235 = vsel %vm97, %v191, 0
    %237 = vmatprep.subr.bf16.mxu0 0
    %238 = vmatpush1.bf16.msra.mxu0 %v235
    %239 = vmatprep.subr.bf16.mxu0 0
    %240 = vmatpush1.bf16.msra.mxu0 0
    %241 = vmatprep.subr.bf16.mxu0 0
    %242 = vmatpush1.bf16.msra.mxu0 0
    %243 = vmatprep.subr.bf16.mxu0 0
    %244 = vmatpush1.bf16.msra.mxu0 0
    %245 = vmatprep.subr.bf16.mxu0 0
    %246 = vmatpush1.bf16.msra.mxu0 0
    %247 = vmatprep.subr.bf16.mxu0 0
    %248 = vmatpush1.bf16.msra.mxu0 0
    %249 = vmatprep.subr.bf16.mxu0 0
    %250 = vmatpush1.bf16.msra.mxu0 0
    %251 = vmatprep.subr.bf16.mxu0 0
    %252 = vmatpush1.bf16.msra.mxu0 0
    %253 = vmatprep.subr.bf16.mxu0 0
    %254 = vmatpush1.bf16.msra.mxu0 0
    %255 = vmatprep.subr.bf16.mxu0 0
    %256 = vmatpush1.bf16.msra.mxu0 0
    %257 = vmatprep.subr.bf16.mxu0 0
    %258 = vmatpush1.bf16.msra.mxu0 0
    %259 = vmatprep.subr.bf16.mxu0 0
    %260 = vmatpush1.bf16.msra.mxu0 0
    %261 = vmatprep.subr.bf16.mxu0 0
    %262 = vmatpush1.bf16.msra.mxu0 0
    %263 = vmatprep.subr.bf16.mxu0 0
    %264 = vmatpush1.bf16.msra.mxu0 0
    %265 = vmatprep.subr.bf16.mxu0 0
    %266 = vmatpush1.bf16.msra.mxu0 0
    %267 = vmatprep.subr.bf16.mxu0 0
    %268 = vmatpush1.bf16.msra.mxu0 0
    %269 = vmatprep.mubr.bf16.mxu0 0
    %270 = vmatmul.mubr.bf16.gmra.mrb[0].mxu0 %v226
    %v271 = vpop.f32.mrb[0].mxu0
    %v272 = vadd.f32 0.0, %v271
    %v273 = vpop.f32.mrb[0].mxu0
    %v274 = vpop.f32.mrb[0].mxu0
    %v275 = vadd.f32 0.0, %v274
    %v276 = vpop.f32.mrb[0].mxu0
    %277 = vmatprep.mubr.bf16.mxu0 0
    %278 = vmatmul.mubr.bf16.gmra.mrb[0].mxu0 %v229
    %v279 = vpop.f32.mrb[0].mxu0
    %v280 = vadd.f32 0.0, %v279
    %v281 = vpop.f32.mrb[0].mxu0
    %v282 = vpop.f32.mrb[0].mxu0
    %v283 = vadd.f32 0.0, %v282
    %v284 = vpop.f32.mrb[0].mxu0
    %285 = vmatprep.mubr.bf16.mxu0 0
    %286 = vmatmul.mubr.bf16.gmra.mrb[0].mxu0 %v232
    %v287 = vpop.f32.mrb[0].mxu0
    %v288 = vadd.f32 0.0, %v287
    %v289 = vpop.f32.mrb[0].mxu0
    %v290 = vpop.f32.mrb[0].mxu0
    %v291 = vpop.f32.mrb[0].mxu0
    %292 = vdwg.mxu0
    %vm293 = vcmask 64512
    %v295 = vsel %vm293, %v188, 0
    %v298 = vsel %vm293, %v189, 0
    %v301 = vsel %vm293, %v190, 0
    %vm303 = vcmask 1043456
    %v305 = vsel %vm303, %v157, 0
    %307 = vmatprep.subr.bf16.mxu0 0
    %308 = vmatpush1.bf16.msra.mxu0 %v305
    %309 = vmatprep.subr.bf16.mxu0 0
    %310 = vmatpush1.bf16.msra.mxu0 0
    %311 = vmatprep.subr.bf16.mxu0 0
    %312 = vmatpush1.bf16.msra.mxu0 0
    %313 = vmatprep.subr.bf16.mxu0 0
    %314 = vmatpush1.bf16.msra.mxu0 0
    %315 = vmatprep.subr.bf16.mxu0 0
    %316 = vmatpush1.bf16.msra.mxu0 0
    %317 = vmatprep.subr.bf16.mxu0 0
    %318 = vmatpush1.bf16.msra.mxu0 0
    %319 = vmatprep.subr.bf16.mxu0 0
    %320 = vmatpush1.bf16.msra.mxu0 0
    %321 = vmatprep.subr.bf16.mxu0 0
    %322 = vmatpush1.bf16.msra.mxu0 0
    %323 = vmatprep.subr.bf16.mxu0 0
    %324 = vmatpush1.bf16.msra.mxu0 0
    %325 = vmatprep.subr.bf16.mxu0 0
    %326 = vmatpush1.bf16.msra.mxu0 0
    %327 = vmatprep.subr.bf16.mxu0 0
    %328 = vmatpush1.bf16.msra.mxu0 0
    %329 = vmatprep.subr.bf16.mxu0 0
    %330 = vmatpush1.bf16.msra.mxu0 0
    %331 = vmatprep.subr.bf16.mxu0 0
    %332 = vmatpush1.bf16.msra.mxu0 0
    %333 = vmatprep.subr.bf16.mxu0 0
    %334 = vmatpush1.bf16.msra.mxu0 0
    %335 = vmatprep.subr.bf16.mxu0 0
    %336 = vmatpush1.bf16.msra.mxu0 0
    %337 = vmatprep.subr.bf16.mxu0 0
    %338 = vmatpush1.bf16.msra.mxu0 0
    %339 = vmatprep.mubr.bf16.mxu0 0
    %340 = vmatmul.mubr.bf16.gmra.mrb[0].mxu0 %v295
    %v341 = vpop.f32.mrb[0].mxu0
    %v342 = vadd.f32 %v272, %v341
    %v343 = vpop.f32.mrb[0].mxu0
    %v344 = vpop.f32.mrb[0].mxu0
    %v345 = vadd.f32 %v275, %v344
    %v346 = vpop.f32.mrb[0].mxu0
    %347 = vmatprep.mubr.bf16.mxu0 0
    %348 = vmatmul.mubr.bf16.gmra.mrb[0].mxu0 %v298
    %v349 = vpop.f32.mrb[0].mxu0
    %v350 = vadd.f32 %v280, %v349
    %v351 = vpop.f32.mrb[0].mxu0
    %v352 = vpop.f32.mrb[0].mxu0
    %v353 = vadd.f32 %v283, %v352
    %v354 = vpop.f32.mrb[0].mxu0
    %355 = vmatprep.mubr.bf16.mxu0 0
    %356 = vmatmul.mubr.bf16.gmra.mrb[0].mxu0 %v301
    %v357 = vpop.f32.mrb[0].mxu0
    %v358 = vadd.f32 %v288, %v357
    %v359 = vpop.f32.mrb[0].mxu0
    %v360 = vpop.f32.mrb[0].mxu0
    %v361 = vpop.f32.mrb[0].mxu0
    %362 = vdwg.mxu0
    %v363 = vld [vmem:[%s3] sm:$0xff]
    %v364 = vld [vmem:[%s3 + $0x8] sm:$0xff]
    %v365 = vld [vmem:[%s3 + $0x10] sm:$0xff]
    %v366 = vld [vmem:[%s3 + $0x18] sm:$0xff]
    %v367 = vld [vmem:[%s3 + $0x20] sm:$0xff]
    %368 = vset.pattern.permute.xlu0 0
    %369 = vperm.xlu0 %368, %v363
    %v370 = vpop.permute.xlu0 %369
    %371 = vset.pattern.permute.xlu0 0
    %372 = vperm.xlu0 %371, %v364
    %v373 = vpop.permute.xlu0 %372
    %374 = vset.pattern.permute.xlu0 0
    %375 = vperm.xlu0 %374, %v365
    %v376 = vpop.permute.xlu0 %375
    %377 = vset.pattern.permute.xlu0 0
    %378 = vperm.xlu0 %377, %v366
    %v379 = vpop.permute.xlu0 %378
    %380 = vset.pattern.permute.xlu0 0
    %381 = vperm.xlu0 %380, %v367
    %v382 = vpop.permute.xlu0 %381
    %vm383 = vcmp.eq.s32.totalorder %v370, %v67
    %vm384 = vcmp.eq.s32.totalorder %v373, %v67
    %vm385 = vcmp.eq.s32.totalorder %v376, %v67
    %vm386 = vcmp.eq.s32.totalorder %v379, %v67
    %vm387 = vcmp.eq.s32.totalorder %v382, %v67
    %v388 = vsel %vm383, 1.0, 0.0
    %v389 = vsel %vm384, 1.0, 0.0
    %v390 = vsel %vm385, 1.0, 0.0
    %v391 = vsel %vm386, 1.0, 0.0
    %v392 = vsel %vm387, 1.0, 0.0
    %v393 = vpack.c.bf16 %v389, %v388
    %v394 = vpack.c.bf16 %v391, %v390
    %v395 = vpack.c.bf16 %v392, %v392
    %vm396 = vcmask 195584
    %v398 = vsel %vm396, %v393, 0
    %v401 = vsel %vm396, %v394, 0
    %v404 = vsel %vm396, %v395, 0
    %v407 = vsel %vm303, %v156, 0
    %409 = vmatprep.subr.bf16.mxu0 0
    %410 = vmatpush1.bf16.msra.mxu0 %v155
    %411 = vmatprep.subr.bf16.mxu0 0
    %412 = vmatpush1.bf16.msra.mxu0 %v407
    %413 = vmatprep.subr.bf16.mxu0 0
    %414 = vmatpush1.bf16.msra.mxu0 0
    %415 = vmatprep.subr.bf16.mxu0 0
    %416 = vmatpush1.bf16.msra.mxu0 0
    %417 = vmatprep.subr.bf16.mxu0 0
    %418 = vmatpush1.bf16.msra.mxu0 0
    %419 = vmatprep.subr.bf16.mxu0 0
    %420 = vmatpush1.bf16.msra.mxu0 0
    %421 = vmatprep.subr.bf16.mxu0 0
    %422 = vmatpush1.bf16.msra.mxu0 0
    %423 = vmatprep.subr.bf16.mxu0 0
    %424 = vmatpush1.bf16.msra.mxu0 0
    %425 = vmatprep.subr.bf16.mxu0 0
    %426 = vmatpush1.bf16.msra.mxu0 0
    %427 = vmatprep.subr.bf16.mxu0 0
    %428 = vmatpush1.bf16.msra.mxu0 0
    %429 = vmatprep.subr.bf16.mxu0 0
    %430 = vmatpush1.bf16.msra.mxu0 0
    %431 = vmatprep.subr.bf16.mxu0 0
    %432 = vmatpush1.bf16.msra.mxu0 0
    %433 = vmatprep.subr.bf16.mxu0 0
    %434 = vmatpush1.bf16.msra.mxu0 0
    %435 = vmatprep.subr.bf16.mxu0 0
    %436 = vmatpush1.bf16.msra.mxu0 0
    %437 = vmatprep.subr.bf16.mxu0 0
    %438 = vmatpush1.bf16.msra.mxu0 0
    %439 = vmatprep.subr.bf16.mxu0 0
    %440 = vmatpush1.bf16.msra.mxu0 0
    %441 = vmatprep.mubr.bf16.mxu0 0
    %442 = vmatmul.mubr.bf16.gmra.mrb[0].mxu0 %v398
    %v443 = vpop.f32.mrb[0].mxu0
    %v444 = vadd.f32 %v342, %v443
    %v445 = vpop.f32.mrb[0].mxu0
    %v446 = vpop.f32.mrb[0].mxu0
    %v447 = vadd.f32 %v345, %v446
    %v448 = vpop.f32.mrb[0].mxu0
    %449 = vmatprep.mubr.bf16.mxu0 0
    %450 = vmatmul.mubr.bf16.gmra.mrb[0].mxu0 %v401
    %v451 = vpop.f32.mrb[0].mxu0
    %v452 = vadd.f32 %v350, %v451
    %v453 = vpop.f32.mrb[0].mxu0
    %v454 = vpop.f32.mrb[0].mxu0
    %v455 = vadd.f32 %v353, %v454
    %v456 = vpop.f32.mrb[0].mxu0
    %457 = vmatprep.mubr.bf16.mxu0 0
    %458 = vmatmul.mubr.bf16.gmra.mrb[0].mxu0 %v404
    %v459 = vpop.f32.mrb[0].mxu0
    %v460 = vadd.f32 %v358, %v459
    %v461 = vpop.f32.mrb[0].mxu0
    %v462 = vpop.f32.mrb[0].mxu0
    %v463 = vpop.f32.mrb[0].mxu0
    %464 = vdwg.mxu0
    %v465 = vmax.f32 %v444, 0.0
    %v466 = vmax.f32 %v447, 0.0
    %v467 = vmax.f32 %v452, 0.0
    %v468 = vmax.f32 %v455, 0.0
    %v469 = vmax.f32 %v460, 0.0
    %v470 = vpack.c.bf16 %v466, %v465
    %v471 = vpack.c.bf16 %v468, %v467
    %v472 = vpack.c.bf16 %v469, %v469
    %v473 = vld [vmem:[%s4] sm:$0x1]
    %v474 = vlaneseq
    %v475 = vshrl.u32 %v474, 7
    %v476 = vadd.s32 %v475, 8
    %v477 = vadd.s32 %v475, 16
    %v478 = vlaneseq
    %v479 = vshrl.u32 %v478, 7
    %v480 = vsub.s32 0, %v479
    %v481 = vrot.slane %v473, %v480
    %vm482 = vcmp.eq.s32.totalorder %v481, %v475
    %vm483 = vcmp.eq.s32.totalorder %v481, %v476
    %vm484 = vcmp.eq.s32.totalorder %v481, %v477
    %v485 = vsel %vm482, 1.0, 0.0
    %v486 = vsel %vm483, 1.0, 0.0
    %v487 = vsel %vm484, 1.0, 0.0
    %v488 = vpack.c.bf16 %v486, %v485
    %v489 = vpack.c.bf16 %v487, %v487
    %vm490 = vcmask 326656
    %v492 = vsel %vm490, %v488, 0
    %v495 = vsel %vm490, %v489, 0
    %v498 = vsel %vm303, %v472, 0
    %500 = vmatprep.subr.bf16.mxu0 0
    %501 = vmatpush1.bf16.msra.mxu0 %v470
    %502 = vmatprep.subr.bf16.mxu0 0
    %503 = vmatpush1.bf16.msra.mxu0 %v471
    %504 = vmatprep.subr.bf16.mxu0 0
    %505 = vmatpush1.bf16.msra.mxu0 %v498
    %506 = vmatprep.subr.bf16.mxu0 0
    %507 = vmatpush1.bf16.msra.mxu0 0
    %508 = vmatprep.subr.bf16.mxu0 0
    %509 = vmatpush1.bf16.msra.mxu0 0
    %510 = vmatprep.subr.bf16.mxu0 0
    %511 = vmatpush1.bf16.msra.mxu0 0
    %512 = vmatprep.subr.bf16.mxu0 0
    %513 = vmatpush1.bf16.msra.mxu0 0
    %514 = vmatprep.subr.bf16.mxu0 0
    %515 = vmatpush1.bf16.msra.mxu0 0
    %516 = vmatprep.subr.bf16.mxu0 0
    %517 = vmatpush1.bf16.msra.mxu0 0
    %518 = vmatprep.subr.bf16.mxu0 0
    %519 = vmatpush1.bf16.msra.mxu0 0
    %520 = vmatprep.subr.bf16.mxu0 0
    %521 = vmatpush1.bf16.msra.mxu0 0
    %522 = vmatprep.subr.bf16.mxu0 0
    %523 = vmatpush1.bf16.msra.mxu0 0
    %524 = vmatprep.subr.bf16.mxu0 0
    %525 = vmatpush1.bf16.msra.mxu0 0
    %526 = vmatprep.subr.bf16.mxu0 0
    %527 = vmatpush1.bf16.msra.mxu0 0
    %528 = vmatprep.subr.bf16.mxu0 0
    %529 = vmatpush1.bf16.msra.mxu0 0
    %530 = vmatprep.subr.bf16.mxu0 0
    %531 = vmatpush1.bf16.msra.mxu0 0
    %532 = vmatprep.mubr.bf16.mxu0 0
    %533 = vmatmul.mubr.bf16.gmra.mrb[0].mxu0 %v492
    %v534 = vpop.f32.mrb[0].mxu0
    %v535 = vadd.f32 0.0, %v534
    %v536 = vpop.f32.mrb[0].mxu0
    %v537 = vpop.f32.mrb[0].mxu0
    %v538 = vadd.f32 0.0, %v537
    %v539 = vpop.f32.mrb[0].mxu0
    %540 = vmatprep.mubr.bf16.mxu0 0
    %541 = vmatmul.mubr.bf16.gmra.mrb[0].mxu0 %v495
    %v542 = vpop.f32.mrb[0].mxu0
    %v543 = vadd.f32 0.0, %v542
    %v544 = vpop.f32.mrb[0].mxu0
    %v545 = vpop.f32.mrb[0].mxu0
    %v546 = vpop.f32.mrb[0].mxu0
    %547 = vdwg.mxu0
    %v548 = vadd.f32 %v149, %v535
    %v549 = vadd.f32 %v150, %v538
    %v550 = vadd.f32 %v151, %v543
    %v551 = vpack.c.bf16 %v549, %v548
    %v552 = vpack.c.bf16 %v550, %v550
    %v553 = vld [vmem:[%s9] sm:$0xff]
    %v554 = vld [vmem:[%s9 + $0x8] sm:$0xff]
    %v555 = vld [vmem:[%s9 + $0x10] sm:$0xff]
    %v556 = vld [vmem:[%s9 + $0x18] sm:$0xff]
    %v557 = vld [vmem:[%s9 + $0x20] sm:$0xff]
    %v558 = vld [vmem:[%s9 + $0x28] sm:$0xff]
    %v559 = vld [vmem:[%s9 + $0x30] sm:$0xff]
    %v560 = vld [vmem:[%s9 + $0x38] sm:$0xff]
    %v561 = vld [vmem:[%s9 + $0x40] sm:$0xff]
    %v562 = vld [vmem:[%s9 + $0x48] sm:$0xff]
    %v563 = vld [vmem:[%s9 + $0x50] sm:$0xff]
    %v564 = vld [vmem:[%s9 + $0x58] sm:$0xff]
    %v565 = vld [vmem:[%s9 + $0x60] sm:$0xff]
    %v566 = vld [vmem:[%s9 + $0x68] sm:$0xff]
    %v567 = vld [vmem:[%s9 + $0x70] sm:$0xff]
    %v568 = vld [vmem:[%s9 + $0x78] sm:$0xff]
    %v569 = vld [vmem:[%s10] sm:$0x3]
    %v571 = vlaneseq
    %v572 = vshrl.u32 %v571, 7
    %v573 = vsub.s32 0, %v572
    %v574 = vrot.slane %v569, %v573
    %v575 = vlaneseq
    %v576 = vshrl.u32 %v575, 7
    %v577 = vsub.s32 1, %v576
    %v578 = vrot.slane %v569, %v577
    %v597 = vunpack.c.l.b16 %v553
    %v598 = vunpack.c.h.b16 %v553
    %v599 = vunpack.c.l.b16 %v554
    %v600 = vunpack.c.h.b16 %v554
    %v601 = vunpack.c.l.b16 %v555
    %v602 = vunpack.c.h.b16 %v555
    %v603 = vunpack.c.l.b16 %v556
    %v604 = vunpack.c.h.b16 %v556
    %v605 = vunpack.c.l.b16 %v557
    %v606 = vunpack.c.h.b16 %v557
    %v607 = vunpack.c.l.b16 %v558
    %v608 = vunpack.c.h.b16 %v558
    %v609 = vunpack.c.l.b16 %v559
    %v610 = vunpack.c.h.b16 %v559
    %v611 = vunpack.c.l.b16 %v560
    %v612 = vunpack.c.h.b16 %v560
    %v613 = vunpack.c.l.b16 %v561
    %v614 = vunpack.c.h.b16 %v561
    %v615 = vunpack.c.l.b16 %v562
    %v616 = vunpack.c.h.b16 %v562
    %v617 = vunpack.c.l.b16 %v563
    %v618 = vunpack.c.h.b16 %v563
    %v619 = vunpack.c.l.b16 %v564
    %v620 = vunpack.c.h.b16 %v564
    %v621 = vunpack.c.l.b16 %v565
    %v622 = vunpack.c.h.b16 %v565
    %v623 = vunpack.c.l.b16 %v566
    %v624 = vunpack.c.h.b16 %v566
    %v625 = vunpack.c.l.b16 %v567
    %v626 = vunpack.c.h.b16 %v567
    %v627 = vunpack.c.l.b16 %v568
    %v628 = vunpack.c.h.b16 %v568
    %v629 = vpack.c.b16 %v599, %v597
    %v630 = vpack.c.b16 %v600, %v598
    %v631 = vpack.c.b16 %v603, %v601
    %v632 = vpack.c.b16 %v604, %v602
    %v633 = vpack.c.b16 %v607, %v605
    %v634 = vpack.c.b16 %v608, %v606
    %v635 = vpack.c.b16 %v611, %v609
    %v636 = vpack.c.b16 %v612, %v610
    %v637 = vpack.c.b16 %v615, %v613
    %v638 = vpack.c.b16 %v616, %v614
    %v639 = vpack.c.b16 %v619, %v617
    %v640 = vpack.c.b16 %v620, %v618
    %v641 = vpack.c.b16 %v623, %v621
    %v642 = vpack.c.b16 %v624, %v622
    %v643 = vpack.c.b16 %v627, %v625
    %v644 = vpack.c.b16 %v628, %v626
    %661 = vmatprep.subr.bf16.mxu0 %v630
    %662 = vmatpush1.bf16.msra.mxu0 %v629
    %663 = vmatprep.subr.bf16.mxu0 %v632
    %664 = vmatpush1.bf16.msra.mxu0 %v631
    %665 = vmatprep.subr.bf16.mxu0 %v634
    %666 = vmatpush1.bf16.msra.mxu0 %v633
    %667 = vmatprep.subr.bf16.mxu0 %v636
    %668 = vmatpush1.bf16.msra.mxu0 %v635
    %669 = vmatprep.subr.bf16.mxu0 %v638
    %670 = vmatpush1.bf16.msra.mxu0 %v637
    %671 = vmatprep.subr.bf16.mxu0 %v640
    %672 = vmatpush1.bf16.msra.mxu0 %v639
    %673 = vmatprep.subr.bf16.mxu0 %v642
    %674 = vmatpush1.bf16.msra.mxu0 %v641
    %675 = vmatprep.subr.bf16.mxu0 %v644
    %676 = vmatpush1.bf16.msra.mxu0 %v643
    %677 = vmatprep.subr.bf16.mxu0 0
    %678 = vmatpush1.bf16.msra.mxu0 0
    %679 = vmatprep.subr.bf16.mxu0 0
    %680 = vmatpush1.bf16.msra.mxu0 0
    %681 = vmatprep.subr.bf16.mxu0 0
    %682 = vmatpush1.bf16.msra.mxu0 0
    %683 = vmatprep.subr.bf16.mxu0 0
    %684 = vmatpush1.bf16.msra.mxu0 0
    %685 = vmatprep.subr.bf16.mxu0 0
    %686 = vmatpush1.bf16.msra.mxu0 0
    %687 = vmatprep.subr.bf16.mxu0 0
    %688 = vmatpush1.bf16.msra.mxu0 0
    %689 = vmatprep.subr.bf16.mxu0 0
    %690 = vmatpush1.bf16.msra.mxu0 0
    %691 = vmatprep.subr.bf16.mxu0 0
    %692 = vmatpush1.bf16.msra.mxu0 0
    %693 = vmatprep.mubr.bf16.mxu0 0
    %694 = vmatmul.mubr.bf16.gmra.mrb[0].mxu0 %v551
    %v695 = vpop.f32.mrb[0].mxu0
    %v696 = vadd.f32 %v574, %v695
    %v697 = vpop.f32.mrb[0].mxu0
    %v698 = vadd.f32 %v578, %v697
    %v699 = vpop.f32.mrb[0].mxu0
    %v700 = vadd.f32 %v574, %v699
    %v701 = vpop.f32.mrb[0].mxu0
    %v702 = vadd.f32 %v578, %v701
    %703 = vmatprep.mubr.bf16.mxu0 0
    %704 = vmatmul.mubr.bf16.gmra.mrb[0].mxu0 %v552
    %v705 = vpop.f32.mrb[0].mxu0
    %v706 = vadd.f32 %v574, %v705
    %v707 = vpop.f32.mrb[0].mxu0
    %v708 = vadd.f32 %v578, %v707
    %v709 = vpop.f32.mrb[0].mxu0
    %v710 = vpop.f32.mrb[0].mxu0
    %711 = vdwg.mxu0
    %v712 = vmax.f32 %v696, 0.0
    %v713 = vmax.f32 %v698, 0.0
    %v714 = vmax.f32 %v700, 0.0
    %v715 = vmax.f32 %v702, 0.0
    %v716 = vmax.f32 %v706, 0.0
    %v717 = vmax.f32 %v708, 0.0
    %v718 = vpack.c.bf16 %v714, %v712
    %v719 = vpack.c.bf16 %v715, %v713
    %v720 = vpack.c.bf16 %v716, %v716
    %v721 = vpack.c.bf16 %v717, %v717
    %v722 = vld [vmem:[#allocation2] sm:$0xf]
    %v723 = vld [vmem:[#allocation2 + $0x4] sm:$0xf]
    %v724 = vld [vmem:[#allocation2 + $0x8] sm:$0xf]
    %v725 = vld [vmem:[#allocation2 + $0xc] sm:$0xf]
    %v726 = vld [vmem:[#allocation2 + $0x10] sm:$0xf]
    %v727 = vld [vmem:[#allocation2 + $0x14] sm:$0xf]
    %v728 = vld [vmem:[#allocation2 + $0x18] sm:$0xf]
    %v729 = vld [vmem:[#allocation2 + $0x1c] sm:$0xf]
    %v730 = vld [vmem:[#allocation2 + $0x20] sm:$0xf]
    %v731 = vld [vmem:[#allocation2 + $0x24] sm:$0xf]
    %v732 = vld [vmem:[#allocation2 + $0x28] sm:$0xf]
    %v733 = vld [vmem:[#allocation2 + $0x2c] sm:$0xf]
    %v734 = vld [vmem:[#allocation2 + $0x30] sm:$0xf]
    %v735 = vld [vmem:[#allocation2 + $0x34] sm:$0xf]
    %v736 = vld [vmem:[#allocation2 + $0x38] sm:$0xf]
    %v737 = vld [vmem:[#allocation2 + $0x3c] sm:$0xf]
    %v738 = vld [vmem:[#allocation2 + $0x40] sm:$0xf]
    %v739 = vld [vmem:[#allocation2 + $0x44] sm:$0xf]
    %v740 = vld [vmem:[#allocation2 + $0x48] sm:$0xf]
    %v741 = vld [vmem:[#allocation2 + $0x4c] sm:$0xf]
    %v742 = vld [vmem:[#allocation2 + $0x50] sm:$0xf]
    %v743 = vld [vmem:[#allocation2 + $0x54] sm:$0xf]
    %v744 = vld [vmem:[#allocation2 + $0x58] sm:$0xf]
    %v745 = vld [vmem:[#allocation2 + $0x5c] sm:$0xf]
    %v746 = vld [vmem:[#allocation2 + $0x60] sm:$0xf]
    %v747 = vld [vmem:[#allocation2 + $0x64] sm:$0xf]
    %v748 = vld [vmem:[#allocation2 + $0x68] sm:$0xf]
    %v749 = vld [vmem:[#allocation2 + $0x6c] sm:$0xf]
    %v750 = vld [vmem:[#allocation2 + $0x70] sm:$0xf]
    %v751 = vld [vmem:[#allocation2 + $0x74] sm:$0xf]
    %v752 = vld [vmem:[#allocation2 + $0x78] sm:$0xf]
    %v753 = vld [vmem:[#allocation2 + $0x7c] sm:$0xf]
    %v754 = vld [vmem:[%s12] sm:$0x1]
    %v756 = vlaneseq
    %v757 = vshrl.u32 %v756, 7
    %v758 = vsub.s32 0, %v757
    %v759 = vrot.slane %v754, %v758
    %v793 = vunpack.c.l.b16 %v722
    %v794 = vunpack.c.l.b16 %v723
    %v795 = vunpack.c.l.b16 %v724
    %v796 = vunpack.c.l.b16 %v725
    %v797 = vunpack.c.l.b16 %v726
    %v798 = vunpack.c.l.b16 %v727
    %v799 = vunpack.c.l.b16 %v728
    %v800 = vunpack.c.l.b16 %v729
    %v801 = vunpack.c.l.b16 %v730
    %v802 = vunpack.c.l.b16 %v731
    %v803 = vunpack.c.l.b16 %v732
    %v804 = vunpack.c.l.b16 %v733
    %v805 = vunpack.c.l.b16 %v734
    %v806 = vunpack.c.l.b16 %v735
    %v807 = vunpack.c.l.b16 %v736
    %v808 = vunpack.c.l.b16 %v737
    %v809 = vunpack.c.l.b16 %v738
    %v810 = vunpack.c.l.b16 %v739
    %v811 = vunpack.c.l.b16 %v740
    %v812 = vunpack.c.l.b16 %v741
    %v813 = vunpack.c.l.b16 %v742
    %v814 = vunpack.c.l.b16 %v743
    %v815 = vunpack.c.l.b16 %v744
    %v816 = vunpack.c.l.b16 %v745
    %v817 = vunpack.c.l.b16 %v746
    %v818 = vunpack.c.l.b16 %v747
    %v819 = vunpack.c.l.b16 %v748
    %v820 = vunpack.c.l.b16 %v749
    %v821 = vunpack.c.l.b16 %v750
    %v822 = vunpack.c.l.b16 %v751
    %v823 = vunpack.c.l.b16 %v752
    %v824 = vunpack.c.l.b16 %v753
    %v825 = vpack.c.b16 %v794, %v793
    %v826 = vpack.c.b16 %v796, %v795
    %v827 = vpack.c.b16 %v798, %v797
    %v828 = vpack.c.b16 %v800, %v799
    %v829 = vpack.c.b16 %v802, %v801
    %v830 = vpack.c.b16 %v804, %v803
    %v831 = vpack.c.b16 %v806, %v805
    %v832 = vpack.c.b16 %v808, %v807
    %v833 = vpack.c.b16 %v810, %v809
    %v834 = vpack.c.b16 %v812, %v811
    %v835 = vpack.c.b16 %v814, %v813
    %v836 = vpack.c.b16 %v816, %v815
    %v837 = vpack.c.b16 %v818, %v817
    %v838 = vpack.c.b16 %v820, %v819
    %v839 = vpack.c.b16 %v822, %v821
    %v840 = vpack.c.b16 %v824, %v823
    %857 = vmatprep.subr.bf16.mxu0 0
    %858 = vmatpush1.bf16.msra.mxu0 %v825
    %859 = vmatprep.subr.bf16.mxu0 0
    %860 = vmatpush1.bf16.msra.mxu0 %v826
    %861 = vmatprep.subr.bf16.mxu0 0
    %862 = vmatpush1.bf16.msra.mxu0 %v827
    %863 = vmatprep.subr.bf16.mxu0 0
    %864 = vmatpush1.bf16.msra.mxu0 %v828
    %865 = vmatprep.subr.bf16.mxu0 0
    %866 = vmatpush1.bf16.msra.mxu0 %v829
    %867 = vmatprep.subr.bf16.mxu0 0
    %868 = vmatpush1.bf16.msra.mxu0 %v830
    %869 = vmatprep.subr.bf16.mxu0 0
    %870 = vmatpush1.bf16.msra.mxu0 %v831
    %871 = vmatprep.subr.bf16.mxu0 0
    %872 = vmatpush1.bf16.msra.mxu0 %v832
    %873 = vmatprep.subr.bf16.mxu0 0
    %874 = vmatpush1.bf16.msra.mxu0 %v833
    %875 = vmatprep.subr.bf16.mxu0 0
    %876 = vmatpush1.bf16.msra.mxu0 %v834
    %877 = vmatprep.subr.bf16.mxu0 0
    %878 = vmatpush1.bf16.msra.mxu0 %v835
    %879 = vmatprep.subr.bf16.mxu0 0
    %880 = vmatpush1.bf16.msra.mxu0 %v836
    %881 = vmatprep.subr.bf16.mxu0 0
    %882 = vmatpush1.bf16.msra.mxu0 %v837
    %883 = vmatprep.subr.bf16.mxu0 0
    %884 = vmatpush1.bf16.msra.mxu0 %v838
    %885 = vmatprep.subr.bf16.mxu0 0
    %886 = vmatpush1.bf16.msra.mxu0 %v839
    %887 = vmatprep.subr.bf16.mxu0 0
    %888 = vmatpush1.bf16.msra.mxu0 %v840
    %889 = vmatprep.mubr.bf16.mxu0 %v719
    %890 = vmatmul.mubr.bf16.gmra.mrb[0].mxu0 %v718
    %v891 = vpop.f32.mrb[0].mxu0
    %v892 = vadd.f32 %v759, %v891
    %v893 = vpop.f32.mrb[0].mxu0
    %v894 = vpop.f32.mrb[0].mxu0
    %v895 = vadd.f32 %v759, %v894
    %v896 = vpop.f32.mrb[0].mxu0
    %897 = vmatprep.mubr.bf16.mxu0 %v721
    %898 = vmatmul.mubr.bf16.gmra.mrb[0].mxu0 %v720
    %v899 = vpop.f32.mrb[0].mxu0
    %v900 = vadd.f32 %v759, %v899
    %v901 = vpop.f32.mrb[0].mxu0
    %v902 = vpop.f32.mrb[0].mxu0
    %v903 = vpop.f32.mrb[0].mxu0
    %904 = vdwg.mxu0
    %v905 = vmax.f32 %v892, 0.0
    %v906 = vmax.f32 %v895, 0.0
    %v907 = vmax.f32 %v900, 0.0
    %908 = vst [vmem:[#allocation5] sm:$0xff] %v905
    %909 = vst [vmem:[#allocation5 + $0x8] sm:$0xff] %v906
    %910 = vst [vmem:[#allocation5 + $0x10] sm:$0xff] %v907
    // Predicated region
    $region58: #{tpu_custom_call.1} parent=1 // pred_check
      _
    $region59: #{tpu_custom_call.1} parent=1 // pred_check_branch
      %912 = sbr.rel (0) target = $region61
    $region60: #{tpu_custom_call.1} parent=1 // pred_region
      %s914 = ssub.s32 384, 384
      %915 = vsyncadd [#allocation4], %s914
      %s916 = sshll.u32 [#allocation5], 4
      %s917 = int_to_ptr.vmem [resolvable:$true] %s916
      %922 = dma.vmem_to_hbm [thread:$0]  %s917, 384, %s13, [#allocation4], 128, 128, 8
    $region61: #{tpu_custom_call.1} parent=1 // pred_fallthru
      _
    // Predicated region
    $region62: #{tpu_custom_call.1} parent=1 // pred_check
      _
    $region63: #{tpu_custom_call.1} parent=1 // pred_check_branch
      %924 = sbr.rel (0) target = $region65
    $region64: #{tpu_custom_call.1} parent=1 // pred_region
      %s926 = ssub.s32 384, 384
      %927 = vsyncadd [#allocation7], %s926
      %s928 = sshll.u32 [#allocation6], 4
      %s929 = int_to_ptr.vmem [resolvable:$true] %s928
      %934 = dma.vmem_to_hbm [thread:$0]  %s929, 384, %s14, [#allocation7], 128, 128, 8
    $region65: #{tpu_custom_call.1} parent=1 // pred_fallthru
      _
    // Predicated region
    $region66: #{tpu_custom_call.1} parent=1 // pred_check
      _
    $region67: #{tpu_custom_call.1} parent=1 // pred_check_branch
      %936 = sbr.rel (0) target = $region69
    $region68: #{tpu_custom_call.1} parent=1 // pred_region
      %937 = dma.done [#allocation4], 384
    $region69: #{tpu_custom_call.1} parent=1 // pred_fallthru
      _
    // Predicated region
    $region70: #{tpu_custom_call.1} parent=1 // pred_check
      _
    $region71: #{tpu_custom_call.1} parent=1 // pred_check_branch
      %939 = sbr.rel (0) target = $region73
    $region72: #{tpu_custom_call.1} parent=1 // pred_region
      %940 = dma.done [#allocation7], 384
    $region73: #{tpu_custom_call.1} parent=1 // pred_fallthru
      _
    %941 = vsyncpa [#allocation3], 1
    %942 = vsyncpa [#allocation4], 1
    %943 = vsyncpa [#allocation7], 1

</llo_original>
